<compile_context>
chip_gen: v7x
topology: tpu7x:2x2x1
jax: 0.10.0
libtpu: 0.0.40
codegen_flags: <defaults>
</compile_context>

<pallas_src>
import functools

import jax
import jax.numpy as jnp
from jax import lax
from jax.experimental import pallas as pl
from jax.experimental.pallas import tpu as pltpu


def _round_up(x, m):
    return ((x + m - 1) // m) * m


def _cdiv(a, b):
    return (a + b - 1) // b


def _focal_modulation(one_minus_pt, gamma):
    """(1 - pt) ** gamma, with small integer gamma lowered to a VPU multiply chain."""
    g = float(gamma)
    if g == int(g) and 0 <= int(g) <= 8:
        gi = int(g)
        if gi == 0:
            return jnp.ones_like(one_minus_pt)
        r = one_minus_pt
        for _ in range(gi - 1):
            r = r * one_minus_pt
        return r
    # general (non-integer) exponent: falls back to pow (exp/log on the EUP)
    return one_minus_pt ** g


def _focal_loss_kernel(x_ref, t_ref, out_ref, *, alpha, gamma,
                       block_rows, block_cols, n_rows, n_cols,
                       mask_rows, mask_cols, hard_targets):
    x = x_ref[...].astype(jnp.float32)
    t = t_ref[...].astype(jnp.float32)

    # Numerically-stable BCE with logits (matches torch binary_cross_entropy_with_logits):
    #   bce = max(x, 0) - x*t + log(1 + exp(-|x|))
    e = jnp.exp(-jnp.abs(x))
    bce = jnp.maximum(x, 0.0) - x * t + jnp.log1p(e)

    if hard_targets:
        # Exact for t in {0, 1}: pt = [t == (x >= 0)] ? 1 : e, all times 1/(1 + e).
        # Saves one full EUP transcendental per element (the exp(-bce)).
        num = jnp.where((t > 0.5) == (x >= 0.0), 1.0, e)
        pt = num * pl.reciprocal(1.0 + e, approx=True)
    else:
        pt = jnp.exp(-bce)

    f_loss = _focal_modulation(1.0 - pt, gamma) * bce
    if float(alpha) != 1.0:
        f_loss = float(alpha) * f_loss

    # Neutralize garbage rows/cols of ragged last blocks (select does not
    # propagate NaN/Inf from the masked branch; must happen before the sum).
    if mask_rows:
        i = pl.program_id(0)
        row = i * block_rows + lax.broadcasted_iota(jnp.int32, (block_rows, 1), 0)
        f_loss = jnp.where(row < n_rows, f_loss, 0.0)
    if mask_cols:
        j = pl.program_id(1)
        col = j * block_cols + lax.broadcasted_iota(jnp.int32, (1, block_cols), 1)
        f_loss = jnp.where(col < n_cols, f_loss, 0.0)

    # Grouped sublane reduce: (block_rows, C) -> (block_rows//8, 8, C) -> sum axis 0.
    # Pure vreg adds (no XLU), full unmasked (8, C) store. Final reduce happens in JAX.
    out_ref[...] = jnp.sum(f_loss.reshape(block_rows // 8, 8, block_cols), axis=0)


def focal_loss(logits, targets, *, alpha=1.0, gamma=2.0, hard_targets=False,
               block_rows=None, block_cols=None, target_tile_bytes=4 << 20):
    assert logits.shape == targets.shape, "logits/targets shape mismatch"
    total_elems = int(logits.size)
    assert total_elems > 0

    # Collapse to 2-D (rows, features) without copying through HBM.
    if logits.ndim == 0:
        logits = logits.reshape(1, 1)
        targets = targets.reshape(1, 1)
    elif logits.ndim == 1:
        L = logits.shape[0]
        width = L
        for w in (4096, 2048, 1024, 512, 256, 128):
            if L % w == 0:
                width = w
                break
        rows = L // width
        logits = logits.reshape(rows, width)
        targets = targets.reshape(rows, width)
    elif logits.ndim > 2:
        logits = logits.reshape(-1, logits.shape[-1])
        targets = targets.reshape(-1, targets.shape[-1])

    N, D = logits.shape

    itemsize = max(jnp.dtype(logits.dtype).itemsize, jnp.dtype(targets.dtype).itemsize)
    min_itemsize = min(jnp.dtype(logits.dtype).itemsize, jnp.dtype(targets.dtype).itemsize)
    # Sublane multiple so both inputs tile legally: f32 -> 8, bf16 -> 16, int8/bool -> 32.
    row_mult = max(8, 32 // int(min_itemsize))

    # Feature-axis (lane) tiling: only when a minimal-height full-D block would
    # exceed the per-block budget (very wide / flattened inputs).
    if block_cols is None:
        if D * itemsize * row_mult <= target_tile_bytes or D <= 128:
            block_cols = D
        else:
            block_cols = max(128, (target_tile_bytes // (row_mult * itemsize)) // 128 * 128)
            block_cols = min(block_cols, _round_up(D, 128))
    else:
        block_cols = D if block_cols >= D else _round_up(int(block_cols), 128)
    block_cols = int(block_cols)

    # Row (sublane) tiling: largest multiple of row_mult within the budget,
    # capped so the parallel grid has >= 2 blocks when possible (v7x megacore).
    if block_rows is None:
        bytes_per_row = block_cols * itemsize
        br = max(row_mult, (target_tile_bytes // bytes_per_row) // row_mult * row_mult)
        br = min(br, max(row_mult, _round_up(_cdiv(N, 2), row_mult)))
        block_rows = min(br, _round_up(N, row_mult))
    else:
        block_rows = min(_round_up(int(block_rows), row_mult), _round_up(N, row_mult))
    block_rows = int(block_rows)

    num_row_blocks = _cdiv(N, block_rows)
    num_col_blocks = _cdiv(D, block_cols)
    mask_rows = (N % block_rows) != 0
    mask_cols = (D % block_cols) != 0

    kernel = functools.partial(
        _focal_loss_kernel,
        alpha=float(alpha),
        gamma=float(gamma),
        block_rows=block_rows,
        block_cols=block_cols,
        n_rows=N,
        n_cols=D,
        mask_rows=mask_rows,
        mask_cols=mask_cols,
        hard_targets=bool(hard_targets),
    )

    partials = pl.pallas_call(
        kernel,
        out_shape=jax.ShapeDtypeStruct(
            (num_row_blocks * 8, num_col_blocks * block_cols), jnp.float32),
        grid_spec=pltpu.PrefetchScalarGridSpec(
            num_scalar_prefetch=0,
            grid=(num_row_blocks, num_col_blocks),
            in_specs=[
                pl.BlockSpec((block_rows, block_cols), lambda i, j: (i, j)),
                pl.BlockSpec((block_rows, block_cols), lambda i, j: (i, j)),
            ],
            out_specs=pl.BlockSpec((8, block_cols), lambda i, j: (i, j)),
        ),
        compiler_params=pltpu.CompilerParams(
            # Every block writes an independent partial -> fully parallel grid
            # (megacore-shardable on v7x); no loop-carried accumulator.
            dimension_semantics=("parallel", "parallel"),
            # 2 inputs x 2 pipeline buffers x <=4 MiB tiles + tiny output blocks
            # stays well inside this on v5e/v6e/v7x.
            vmem_limit_bytes=32 << 20,
        ),
    )(logits, targets)

    # Masked padded regions contributed exact zeros, so a full sum is unbiased.
    return jnp.sum(partials) / float(total_elems)


def _focal_loss_ref(logits, targets, alpha=1.0, gamma=2.0):
    x = logits.astype(jnp.float32)
    t = targets.astype(jnp.float32)
    bce = jnp.maximum(x, 0.0) - x * t + jnp.log1p(jnp.exp(-jnp.abs(x)))
    pt = jnp.exp(-bce)
    return jnp.mean(alpha * (1.0 - pt) ** gamma * bce)


if __name__ == "__main__":
    # FocalLoss(alpha=1, gamma=2) — no learned parameters to initialize.
    key = jax.random.PRNGKey(0)
    k1, k2 = jax.random.split(key)

    N, D = 32, 256  # small synthetic shapes (2 row blocks -> exercises the grid)
    logits = jax.random.normal(k1, (N, D), dtype=jnp.float32)
    targets = (jax.random.uniform(k2, (N, D)) > 0.5).astype(jnp.float32)

    ref = _focal_loss_ref(logits, targets, alpha=1.0, gamma=2.0)

    # Default exact path (valid for arbitrary soft targets).
    loss = focal_loss(logits, targets, alpha=1.0, gamma=2.0)
    jax.block_until_ready(loss)
    if not jnp.allclose(loss, ref, rtol=1e-5, atol=1e-6):
        raise AssertionError(f"mismatch (exact path): kernel={loss} ref={ref}")

    # Hard-target path (one fewer EUP transcendental; uses approx reciprocal).
    loss_hard = focal_loss(logits, targets, alpha=1.0, gamma=2.0, hard_targets=True)
    jax.block_until_ready(loss_hard)
    if not jnp.allclose(loss_hard, ref, rtol=5e-3, atol=1e-5):
        raise AssertionError(f"mismatch (hard-target path): kernel={loss_hard} ref={ref}")

    print("KERNEL_OK")
</pallas_src>

<mosaic_0001>
module attributes {stable_mosaic.version = 11 : i64} {
  func.func @_focal_loss_kernel(%arg0: i32, %arg1: i32, %arg2: memref<16x256xf32, #tpu.memory_space<vmem>>, %arg3: memref<16x256xf32, #tpu.memory_space<vmem>>, %arg4: memref<8x256xf32, #tpu.memory_space<vmem>>) attributes {dimension_semantics = [#tpu.dimension_semantics<parallel>, #tpu.dimension_semantics<parallel>], iteration_bounds = array<i64: 2, 1>, scalar_prefetch = 0 : i64, scratch_operands = 0 : i64, tpu.core_type = #tpu.core_type<tc>, window_params = [{transform_indices = @transform_0, window_bounds = array<i64: 16, 256>}, {transform_indices = @transform_1, window_bounds = array<i64: 16, 256>}, {transform_indices = @transform_2, window_bounds = array<i64: 8, 256>}]} {
    %c0 = arith.constant 0 : index
    %c0_0 = arith.constant 0 : index
    %0 = vector.load %arg2[%c0, %c0_0] : memref<16x256xf32, #tpu.memory_space<vmem>>, vector<16x256xf32>
    %c0_1 = arith.constant 0 : index
    %c0_2 = arith.constant 0 : index
    %1 = vector.load %arg3[%c0_1, %c0_2] : memref<16x256xf32, #tpu.memory_space<vmem>>, vector<16x256xf32>
    %2 = math.absf %0 : vector<16x256xf32>
    %cst = arith.constant 0.000000e+00 : f32
    %3 = vector.broadcast %cst : f32 to vector<16x256xf32>
    %4 = arith.subf %3, %2 : vector<16x256xf32>
    %5 = math.exp %4 : vector<16x256xf32>
    %cst_3 = arith.constant 0.000000e+00 : f32
    %6 = vector.broadcast %cst_3 : f32 to vector<16x256xf32>
    %7 = arith.maximumf %0, %6 : vector<16x256xf32>
    %8 = arith.mulf %0, %1 : vector<16x256xf32>
    %9 = arith.subf %7, %8 : vector<16x256xf32>
    %10 = math.log1p %5 : vector<16x256xf32>
    %11 = arith.addf %9, %10 : vector<16x256xf32>
    %cst_4 = arith.constant 0.000000e+00 : f32
    %12 = vector.broadcast %cst_4 : f32 to vector<16x256xf32>
    %13 = arith.subf %12, %11 : vector<16x256xf32>
    %14 = math.exp %13 : vector<16x256xf32>
    %cst_5 = arith.constant 1.000000e+00 : f32
    %15 = vector.broadcast %cst_5 : f32 to vector<16x256xf32>
    %16 = arith.subf %15, %14 : vector<16x256xf32>
    %17 = arith.mulf %16, %16 : vector<16x256xf32>
    %18 = arith.mulf %17, %11 : vector<16x256xf32>
    %19 = vector.shape_cast %18 : vector<16x256xf32> to vector<2x8x256xf32>
    %cst_6 = arith.constant dense<0.000000e+00> : vector<8x256xf32>
    %20 = vector.multi_reduction <add>, %19, %cst_6 [0] : vector<2x8x256xf32> to vector<8x256xf32>
    %c0_7 = arith.constant 0 : index
    %c0_8 = arith.constant 0 : index
    %21 = vector.load %arg4[%c0_7, %c0_8] : memref<8x256xf32, #tpu.memory_space<vmem>>, vector<8x256xf32>
    tpu.vector_store %arg4[%c0_7, %c0_8], %20 {strides = array<i32>} : memref<8x256xf32, #tpu.memory_space<vmem>>, vector<8x256xf32>,
    return
  }
  func.func @transform_0(%arg0: i32, %arg1: i32) -> (i32, i32) {
    %c0_i32 = arith.constant 0 : i32
    return %arg0, %arg1 : i32, i32
  }
  func.func @transform_1(%arg0: i32, %arg1: i32) -> (i32, i32) {
    %c0_i32 = arith.constant 0 : i32
    return %arg0, %arg1 : i32, i32
  }
  func.func @transform_2(%arg0: i32, %arg1: i32) -> (i32, i32) {
    %c0_i32 = arith.constant 0 : i32
    return %arg0, %arg1 : i32, i32
  }
}

</mosaic_0001>

<llo_original>
// kernel: tpu_custom_call.1
$region0: #{tpu_custom_call.1}
  #allocation0 [shape = 'u32[]', space=smem, size = 0x4, offset = 0x4, fixed_abs, tag = 'smem constant byte address 0x4 - core index']
  #allocation1 [shape = 'u32[144,128]{1,0:T(1,128)}', space=vmem, size = 0x12000, scoped, tag = 'internal scratch']
  %s0 = inlined_call_operand.hbm [shape: f32[32,256], index: 0, kind: input, shape index: {}]
  %s1 = inlined_call_operand.hbm [shape: f32[32,256], index: 1, kind: input, shape index: {}]
  %s2 = inlined_call_operand.hbm [shape: f32[16,256], index: 2, kind: output, shape index: {}]
  %s3 = sld [smem:[#allocation0]]
  $region49: #{tpu_custom_call.1} parent=0
    _
  %s5 = ssub.s32 1, %s3
  %s6 = scalar_select 0, %s5, %s3
  $region1: #{tpu_custom_call.1} parent=0
    #allocation2 [shape = 'u8[32768]{0}', space=vmem, size = 0x8000, scoped, tag = 'input window, operand 0']
    #allocation3 [shape = 's32[2]{0}', space=sflag, size = 0x8, scoped, tag = 'scoped memory for tpu_custom_call.1']
    #allocation4 [shape = 's32[2]{0}', space=sflag, size = 0x8, scoped, tag = 'scoped memory for tpu_custom_call.1']
    #allocation5 [shape = 'u8[32768]{0}', space=vmem, size = 0x8000, scoped, tag = 'input window, operand 1']
    #allocation6 [shape = 's32[2]{0}', space=sflag, size = 0x8, scoped, tag = 'scoped memory for tpu_custom_call.1']
    #allocation7 [shape = 'u8[16384]{0}', space=vmem, size = 0x4000, scoped, tag = 'output window, operand 0']
    %7 = vsyncpa [#allocation3], 0
    %s8 = scalar_lea.sflag [#allocation3], 1
    %9 = vsyncpa %s8, 0
    %10 = vsyncpa [#allocation6], 0
    %s11 = scalar_lea.sflag [#allocation6], 1
    %12 = vsyncpa %s11, 0
    %13 = vsyncpa [#allocation4], 0
    %s14 = scalar_lea.sflag [#allocation4], 1
    %15 = vsyncpa %s14, 0
    loop: start=0, step=1, limit=4
    $region2: #{tpu_custom_call.1} parent=1 // loop_pre_header
      _
    $region3: #{tpu_custom_call.1} parent=1 // loop_header
      %s17 = sphi 0, %s21
      %p18 = scmp.ge.s32.totalorder %s17, 4
      %s24 = sphi 0, %s36
      %s25 = sphi 0, %s32
      %s26 = sphi 0, %s24
      %s27 = sphi 0, %s25
      %s28 = sphi 0, %s26
      %s29 = sphi 0, %s27
      %s41 = sphi 0, %s43
      %s44 = sphi 0, %s41
      %s45 = sphi 0, %s44
      %s61 = sphi 0, %s45
      %s69 = sphi 0, %s71
      %s72 = sphi 0, %s69
      %s73 = sphi 0, %s72
      %s89 = sphi 0, %s73
      %s97 = sphi 0, %s99
      %s100 = sphi 0, %s97
      %s101 = sphi 0, %s100
      %s117 = sphi 0, %s101
    $region4: #{tpu_custom_call.1} parent=1 // loop_header_branch
      %20 = sbr.rel (%p18) target = $region8
    $region5: #{tpu_custom_call.1} parent=1 // loop_body
      %s22 = ssub.s32 %s17, 1
      %s23 = ssub.s32 %s17, 2
      %s30 = sadd.s32 1, %s25
      %p31 = scmp.ge.s32.totalorder %s30, 1
      %s32 = scalar_select %p31, 0, %s30
      %s33 = sadd.s32 1, %s24
      %s34 = scalar_select %p31, %s33, %s24
      %p35 = scmp.ge.s32.totalorder %s34, 2
      %s36 = scalar_select %p35, 0, %s34
      %s37 = ssub.s32 %s24, %s36
      %s38 = ssub.s32 %s25, %s32
      %s39 = sor.u32 %s37, %s38
      %p40 = scmp.eq.s32.totalorder %s39, 0
      %s42 = sadd.s32 %s41, 1
      %s43 = scalar_select %p40, %s41, %s42
      %p46 = pneg %p40
      %p47 = scmp.eq.s32.totalorder %s17, 1
      %p48 = por %p46, %p47
      %p49 = scmp.ne.s32.totalorder %s41, %s44
      %p50 = scmp.eq.s32.totalorder %s17, 0
      %p51 = por %p49, %p50
      %p52 = scmp.ne.s32.totalorder %s41, %s44
      %p53 = scmp.eq.s32.totalorder %s22, 1
      %p54 = por %p52, %p53
      %p55 = scmp.ne.s32.totalorder %s44, %s45
      %p56 = scmp.eq.s32.totalorder %s22, 0
      %p57 = por %p55, %p56
      %p58 = scmp.ne.s32.totalorder %s44, %s45
      %p59 = scmp.eq.s32.totalorder %s23, 1
      %p60 = por %p58, %p59
      %p62 = scmp.ne.s32.totalorder %s45, %s61
      %p63 = scmp.eq.s32.totalorder %s23, 0
      %p64 = por %p62, %p63
      %s65 = ssub.s32 %s24, %s36
      %s66 = ssub.s32 %s25, %s32
      %s67 = sor.u32 %s65, %s66
      %p68 = scmp.eq.s32.totalorder %s67, 0
      %s70 = sadd.s32 %s69, 1
      %s71 = scalar_select %p68, %s69, %s70
      %p74 = pneg %p68
      %p75 = scmp.eq.s32.totalorder %s17, 1
      %p76 = por %p74, %p75
      %p77 = scmp.ne.s32.totalorder %s69, %s72
      %p78 = scmp.eq.s32.totalorder %s17, 0
      %p79 = por %p77, %p78
      %p80 = scmp.ne.s32.totalorder %s69, %s72
      %p81 = scmp.eq.s32.totalorder %s22, 1
      %p82 = por %p80, %p81
      %p83 = scmp.ne.s32.totalorder %s72, %s73
      %p84 = scmp.eq.s32.totalorder %s22, 0
      %p85 = por %p83, %p84
      %p86 = scmp.ne.s32.totalorder %s72, %s73
      %p87 = scmp.eq.s32.totalorder %s23, 1
      %p88 = por %p86, %p87
      %p90 = scmp.ne.s32.totalorder %s73, %s89
      %p91 = scmp.eq.s32.totalorder %s23, 0
      %p92 = por %p90, %p91
      %s93 = ssub.s32 %s24, %s36
      %s94 = ssub.s32 %s25, %s32
      %s95 = sor.u32 %s93, %s94
      %p96 = scmp.eq.s32.totalorder %s95, 0
      %s98 = sadd.s32 %s97, 1
      %s99 = scalar_select %p96, %s97, %s98
      %p102 = pneg %p96
      %p103 = scmp.eq.s32.totalorder %s17, 1
      %p104 = por %p102, %p103
      %p105 = scmp.ne.s32.totalorder %s97, %s100
      %p106 = scmp.eq.s32.totalorder %s17, 0
      %p107 = por %p105, %p106
      %p108 = scmp.ne.s32.totalorder %s97, %s100
      %p109 = scmp.eq.s32.totalorder %s22, 1
      %p110 = por %p108, %p109
      %p111 = scmp.ne.s32.totalorder %s100, %s101
      %p112 = scmp.eq.s32.totalorder %s22, 0
      %p113 = por %p111, %p112
      %p114 = scmp.ne.s32.totalorder %s100, %s101
      %p115 = scmp.eq.s32.totalorder %s23, 1
      %p116 = por %p114, %p115
      %p118 = scmp.ne.s32.totalorder %s101, %s117
      %p119 = scmp.eq.s32.totalorder %s23, 0
      %p120 = por %p118, %p119
      %p121 = scmp.le.s32.totalorder 1, %s17
      %p122 = scmp.lt.s32.totalorder %s17, 3
      %p123 = pnand %p121, %p122
      %p124 = pneg %p123
      // Predicated region
      $region9: #{tpu_custom_call.1} parent=5 // pred_check
        _
      $region10: #{tpu_custom_call.1} parent=5 // pred_check_branch
        %126 = sbr.rel (%p123) target = $region12
      $region11: #{tpu_custom_call.1} parent=5 // pred_region
        %s127 = ssub.s32 %s17, 1
      $region12: #{tpu_custom_call.1} parent=5 // pred_fallthru
        _
      %p128 = scmp.lt.s32.totalorder %s17, 2
      // Predicated region
      $region13: #{tpu_custom_call.1} parent=5 // pred_check
        %p129 = pneg %p128
      $region14: #{tpu_custom_call.1} parent=5 // pred_check_branch
        %131 = sbr.rel (%p129) target = $region16
      $region15: #{tpu_custom_call.1} parent=5 // pred_region
        // Predicated region
        $region17: #{tpu_custom_call.1} parent=15 // pred_check
          %p132 = pneg %p51
        $region18: #{tpu_custom_call.1} parent=15 // pred_check_branch
          %134 = sbr.rel (%p132) target = $region20
        $region19: #{tpu_custom_call.1} parent=15 // pred_region
          %s135 = sand.u32 %s41, 1
          %s136 = scalar_lea.sflag [#allocation3], %s135
          %s137 = sand.u32 %s41, 1
          %s138 = smul.addr %s137, 32
          %s139 = scalar_lea.vmem [#allocation2], %s138
          %s140 = smul.u32 2, %s24
          %s141 = smul.u32 2, %s25
          %s143 = ssub.s32 512, 512
          %144 = vsyncadd %s136, %s143
          %s145 = smul.addr %s140, 2
          %s146 = sadd.s32 %s141, %s145
          %s147 = smul.addr %s146, 128
          %s148 = scalar_lea.hbm %s0, %s147
          %s149 = sshll.u32 %s139, 4
          %s150 = int_to_ptr.vmem [resolvable:$true] %s149
          %155 = dma.hbm_to_vmem [thread:$0]  %s148, 512, %s150, %s136, 256, 256, 16
        $region20: #{tpu_custom_call.1} parent=15 // pred_fallthru
          _
        // Predicated region
        $region21: #{tpu_custom_call.1} parent=15 // pred_check
          %p156 = pneg %p79
        $region22: #{tpu_custom_call.1} parent=15 // pred_check_branch
          %158 = sbr.rel (%p156) target = $region24
        $region23: #{tpu_custom_call.1} parent=15 // pred_region
          %s159 = sand.u32 %s69, 1
          %s160 = scalar_lea.sflag [#allocation6], %s159
          %s161 = sand.u32 %s69, 1
          %s162 = smul.addr %s161, 32
          %s163 = scalar_lea.vmem [#allocation5], %s162
          %s164 = smul.u32 2, %s24
          %s165 = smul.u32 2, %s25
          %s167 = ssub.s32 512, 512
          %168 = vsyncadd %s160, %s167
          %s169 = smul.addr %s164, 2
          %s170 = sadd.s32 %s165, %s169
          %s171 = smul.addr %s170, 128
          %s172 = scalar_lea.hbm %s1, %s171
          %s173 = sshll.u32 %s163, 4
          %s174 = int_to_ptr.vmem [resolvable:$true] %s173
          %179 = dma.hbm_to_vmem [thread:$0]  %s172, 512, %s174, %s160, 256, 256, 16
        $region24: #{tpu_custom_call.1} parent=15 // pred_fallthru
          _
      $region16: #{tpu_custom_call.1} parent=5 // pred_fallthru
        _
      %p180 = scmp.le.s32.totalorder 1, %s17
      %p181 = scmp.lt.s32.totalorder %s17, 3
      %p182 = pnand %p180, %p181
      %p183 = pneg %p182
      // Predicated region
      $region25: #{tpu_custom_call.1} parent=5 // pred_check
        _
      $region26: #{tpu_custom_call.1} parent=5 // pred_check_branch
        %185 = sbr.rel (%p182) target = $region28
      $region27: #{tpu_custom_call.1} parent=5 // pred_region
        %s186 = ssub.s32 %s17, 1
        %s187 = sand.u32 %s44, 1
        %s188 = scalar_lea.sflag [#allocation3], %s187
        %s189 = sand.u32 %s44, 1
        %s190 = smul.addr %s189, 32
        %s191 = scalar_lea.vmem [#allocation2], %s190
        // Predicated region
        $region29: #{tpu_custom_call.1} parent=27 // pred_check
          %p192 = pneg %p57
        $region30: #{tpu_custom_call.1} parent=27 // pred_check_branch
          %194 = sbr.rel (%p192) target = $region32
        $region31: #{tpu_custom_call.1} parent=27 // pred_region
          %195 = dma.done %s188, 512
        $region32: #{tpu_custom_call.1} parent=27 // pred_fallthru
          _
        %s196 = sand.u32 %s72, 1
        %s197 = scalar_lea.sflag [#allocation6], %s196
        %s198 = sand.u32 %s72, 1
        %s199 = smul.addr %s198, 32
        %s200 = scalar_lea.vmem [#allocation5], %s199
        // Predicated region
        $region33: #{tpu_custom_call.1} parent=27 // pred_check
          %p201 = pneg %p85
        $region34: #{tpu_custom_call.1} parent=27 // pred_check_branch
          %203 = sbr.rel (%p201) target = $region36
        $region35: #{tpu_custom_call.1} parent=27 // pred_region
          %204 = dma.done %s197, 512
        $region36: #{tpu_custom_call.1} parent=27 // pred_fallthru
          _
        %s205 = sand.u32 %s44, 1
        %s206 = scalar_lea.sflag [#allocation3], %s205
        %s207 = sand.u32 %s44, 1
        %s208 = smul.addr %s207, 32
        %s209 = scalar_lea.vmem [#allocation2], %s208
        %p210 = pneg %p57
        %p211 = pneg %p54
        %s212 = sand.u32 %s72, 1
        %s213 = scalar_lea.sflag [#allocation6], %s212
        %s214 = sand.u32 %s72, 1
        %s215 = smul.addr %s214, 32
        %s216 = scalar_lea.vmem [#allocation5], %s215
        %p217 = pneg %p85
        %p218 = pneg %p82
        %p219 = pneg %p113
        %p220 = pneg %p110
        %s221 = sand.u32 %s100, 1
        %s222 = scalar_lea.sflag [#allocation4], %s221
        %s223 = sand.u32 %s100, 1
        %s224 = smul.addr %s223, 16
        %s225 = scalar_lea.vmem [#allocation7], %s224
        %s226 = smul.u32 2, %s26
        %s227 = smul.u32 2, %s27
        %s228 = smul.u32 2, %s26
        %s229 = smul.u32 2, %s27
        %s230 = smul.u32 2, %s27
        %v231 = vld [vmem:[%s191] sm:$0xff]
        %v232 = vld [vmem:[%s191 + $0x8] sm:$0xff]
        %v233 = vld [vmem:[%s191 + $0x10] sm:$0xff]
        %v234 = vld [vmem:[%s191 + $0x18] sm:$0xff]
        %v235 = vld [vmem:[%s200] sm:$0xff]
        %v236 = vld [vmem:[%s200 + $0x8] sm:$0xff]
        %v237 = vld [vmem:[%s200 + $0x10] sm:$0xff]
        %v238 = vld [vmem:[%s200 + $0x18] sm:$0xff]
        %v239 = vand.u32 2147483647, %v231
        %v240 = vand.u32 2147483647, %v232
        %v241 = vand.u32 2147483647, %v233
        %v242 = vand.u32 2147483647, %v234
        %v243 = vsub.f32 0.0, %v239
        %v244 = vsub.f32 0.0, %v240
        %v245 = vsub.f32 0.0, %v241
        %v246 = vsub.f32 0.0, %v242
        %v247 = vmul.f32 %v243, 1.442695
        %v248 = vpow.pop %v247
        %v249 = vmul.f32 %v244, 1.442695
        %v250 = vpow.pop %v249
        %v251 = vmul.f32 %v245, 1.442695
        %v252 = vpow.pop %v251
        %v253 = vmul.f32 %v246, 1.442695
        %v254 = vpow.pop %v253
        %v255 = vmax.f32 %v231, 0.0
        %v256 = vmax.f32 %v232, 0.0
        %v257 = vmax.f32 %v233, 0.0
        %v258 = vmax.f32 %v234, 0.0
        %v259 = vmul.f32 %v231, %v235
        %v260 = vmul.f32 %v232, %v236
        %v261 = vmul.f32 %v233, %v237
        %v262 = vmul.f32 %v234, %v238
        %v263 = vsub.f32 %v255, %v259
        %v264 = vsub.f32 %v256, %v260
        %v265 = vsub.f32 %v257, %v261
        %v266 = vsub.f32 %v258, %v262
        %v267 = vadd.f32 %v248, 1.0
        %v268 = vlog2.pop %v267
        %v269 = vmul.f32 %v268, 0.6931472
        %v270 = vmul.f32 -0.5, %v248
        %v271 = vadd.f32 %v270, 1.0
        %v272 = vmul.f32 %v271, %v248
        %v273 = vand.u32 2147483647, %v248
        %vm274 = vcmp.lt.f32.partialorder %v273, 0.0004427343
        %v275 = vsel %vm274, %v272, %v269
        %v276 = vadd.f32 %v250, 1.0
        %v277 = vlog2.pop %v276
        %v278 = vmul.f32 %v277, 0.6931472
        %v279 = vmul.f32 -0.5, %v250
        %v280 = vadd.f32 %v279, 1.0
        %v281 = vmul.f32 %v280, %v250
        %v282 = vand.u32 2147483647, %v250
        %vm283 = vcmp.lt.f32.partialorder %v282, 0.0004427343
        %v284 = vsel %vm283, %v281, %v278
        %v285 = vadd.f32 %v252, 1.0
        %v286 = vlog2.pop %v285
        %v287 = vmul.f32 %v286, 0.6931472
        %v288 = vmul.f32 -0.5, %v252
        %v289 = vadd.f32 %v288, 1.0
        %v290 = vmul.f32 %v289, %v252
        %v291 = vand.u32 2147483647, %v252
        %vm292 = vcmp.lt.f32.partialorder %v291, 0.0004427343
        %v293 = vsel %vm292, %v290, %v287
        %v294 = vadd.f32 %v254, 1.0
        %v295 = vlog2.pop %v294
        %v296 = vmul.f32 %v295, 0.6931472
        %v297 = vmul.f32 -0.5, %v254
        %v298 = vadd.f32 %v297, 1.0
        %v299 = vmul.f32 %v298, %v254
        %v300 = vand.u32 2147483647, %v254
        %vm301 = vcmp.lt.f32.partialorder %v300, 0.0004427343
        %v302 = vsel %vm301, %v299, %v296
        %v303 = vadd.f32 %v263, %v275
        %v304 = vadd.f32 %v264, %v284
        %v305 = vadd.f32 %v265, %v293
        %v306 = vadd.f32 %v266, %v302
        %v307 = vsub.f32 0.0, %v303
        %v308 = vsub.f32 0.0, %v304
        %v309 = vsub.f32 0.0, %v305
        %v310 = vsub.f32 0.0, %v306
        %v311 = vmul.f32 %v307, 1.442695
        %v312 = vpow.pop %v311
        %v313 = vmul.f32 %v308, 1.442695
        %v314 = vpow.pop %v313
        %v315 = vmul.f32 %v309, 1.442695
        %v316 = vpow.pop %v315
        %v317 = vmul.f32 %v310, 1.442695
        %v318 = vpow.pop %v317
        %v319 = vsub.f32 1.0, %v312
        %v320 = vsub.f32 1.0, %v314
        %v321 = vsub.f32 1.0, %v316
        %v322 = vsub.f32 1.0, %v318
        %v323 = vmul.f32 %v319, %v319
        %v324 = vmul.f32 %v320, %v320
        %v325 = vmul.f32 %v321, %v321
        %v326 = vmul.f32 %v322, %v322
        %v327 = vmul.f32 %v323, %v303
        %v328 = vmul.f32 %v324, %v304
        %v329 = vmul.f32 %v325, %v305
        %v330 = vmul.f32 %v326, %v306
        %v331 = vadd.f32 %v327, %v329
        %v332 = vadd.f32 %v328, %v330
        %333 = vst [vmem:[%s225] sm:$0xff] %v331
        %334 = vst [vmem:[%s225 + $0x8] sm:$0xff] %v332
        %s335 = sand.u32 %s100, 1
        %s336 = scalar_lea.sflag [#allocation4], %s335
        %s337 = sand.u32 %s100, 1
        %s338 = smul.addr %s337, 16
        %s339 = scalar_lea.vmem [#allocation7], %s338
        // Predicated region
        $region37: #{tpu_custom_call.1} parent=27 // pred_check
          %p340 = pneg %p110
        $region38: #{tpu_custom_call.1} parent=27 // pred_check_branch
          %342 = sbr.rel (%p340) target = $region40
        $region39: #{tpu_custom_call.1} parent=27 // pred_region
          %s343 = smul.u32 2, %s27
          %s345 = ssub.s32 256, 256
          %346 = vsyncadd %s336, %s345
          %s347 = smul.addr %s26, 2
          %s348 = sadd.s32 %s343, %s347
          %s349 = smul.addr %s348, 128
          %s350 = scalar_lea.hbm %s2, %s349
          %s352 = sshll.u32 %s339, 4
          %s353 = int_to_ptr.vmem [resolvable:$true] %s352
          %355 = dma.vmem_to_hbm [thread:$0]  %s353, 256, %s350, %s336
        $region40: #{tpu_custom_call.1} parent=27 // pred_fallthru
          _
      $region28: #{tpu_custom_call.1} parent=5 // pred_fallthru
        _
      %p356 = scmp.le.s32.totalorder 2, %s17
      // Predicated region
      $region41: #{tpu_custom_call.1} parent=5 // pred_check
        %p357 = pneg %p356
      $region42: #{tpu_custom_call.1} parent=5 // pred_check_branch
        %359 = sbr.rel (%p357) target = $region44
      $region43: #{tpu_custom_call.1} parent=5 // pred_region
        %s360 = ssub.s32 %s17, 2
        // Predicated region
        $region45: #{tpu_custom_call.1} parent=43 // pred_check
          %p361 = pneg %p116
        $region46: #{tpu_custom_call.1} parent=43 // pred_check_branch
          %363 = sbr.rel (%p361) target = $region48
        $region47: #{tpu_custom_call.1} parent=43 // pred_region
          %s364 = sand.u32 %s101, 1
          %s365 = scalar_lea.sflag [#allocation4], %s364
          %s366 = sand.u32 %s101, 1
          %s367 = smul.addr %s366, 16
          %s368 = scalar_lea.vmem [#allocation7], %s367
          %369 = dma.done %s365, 256
        $region48: #{tpu_custom_call.1} parent=43 // pred_fallthru
          _
      $region44: #{tpu_custom_call.1} parent=5 // pred_fallthru
        _
    $region6: #{tpu_custom_call.1} parent=1 // loop_footer
      %s21 = sadd.s32 1, %s17
    $region7: #{tpu_custom_call.1} parent=1 // loop_footer_branch
      %16 = sbr.rel target = $region3
    $region8: #{tpu_custom_call.1} parent=1 // loop_exit
      _
    %370 = vsyncpa [#allocation3], 1
    %s371 = scalar_lea.sflag [#allocation3], 1
    %372 = vsyncpa %s371, 1
    %373 = vsyncpa [#allocation6], 1
    %s374 = scalar_lea.sflag [#allocation6], 1
    %375 = vsyncpa %s374, 1
    %376 = vsyncpa [#allocation4], 1
    %s377 = scalar_lea.sflag [#allocation4], 1
    %378 = vsyncpa %s377, 1

</llo_original>
